<compile_context>
chip_gen: v5e
topology: v5e:2x2
jax: 0.10.0
libtpu: 0.0.40
codegen_flags: <defaults>
</compile_context>

<pallas_src>
import math

import jax
import jax.numpy as jnp
from jax.experimental import pallas as pl
from jax.experimental.pallas import tpu as pltpu


# ---------------------------------------------------------------------------
# helpers
# ---------------------------------------------------------------------------
def _round_up(x: int, m: int) -> int:
    return ((x + m - 1) // m) * m


def _pad2d(a, rows, cols):
    r, c = a.shape
    return jnp.pad(a, ((0, rows - r), (0, cols - c)))


def _vmem_cap_bytes() -> int:
    """Per-generation safe scoped-VMEM cap (physical: 128/128/64 MiB)."""
    try:
        kind = jax.devices()[0].device_kind.lower()
    except Exception:  # pragma: no cover - defensive
        kind = ""
    if "v7" in kind:
        return 48 * (1 << 20)     # 64 MiB/TC physical -> leave headroom
    return 100 * (1 << 20)        # v5e / v6e: 128 MiB physical


def _pick_batch_tile(B: int):
    """Sublane-aligned batch tile; guarantees >=2 grid steps when possible so
    the 'parallel' axis can shard across both v7x TensorCores."""
    B8 = _round_up(B, 8)
    TM_target = 512               # 256-multiple M tiles feed the 2x256x256 MXU well
    if B8 >= 16:
        TM = min(TM_target, _round_up(pl.cdiv(B8, 2), 8))
    else:
        TM = B8
    B_pad = _round_up(B8, TM)
    return TM, B_pad


def _cost_estimate(B, dims, compute_dtype):
    """Advisory cost, computed on true (unpadded) dims."""
    cdt = jnp.dtype(compute_dtype).itemsize
    n = len(dims) - 1
    flops = sum(2 * B * dims[i] * dims[i + 1] for i in range(n))
    transcendentals = sum(B * dims[i + 1] for i in range(n))
    bytes_accessed = (B * dims[0] * cdt
                      + sum(dims[i] * dims[i + 1] * cdt + dims[i + 1] * 4
                            for i in range(n))
                      + B * dims[-1] * 4)
    return pl.CostEstimate(flops=flops, transcendentals=transcendentals,
                           bytes_accessed=bytes_accessed)


def _vmem_limit_bytes(padded_wb, TM, dims_pad, compute_dtype,
                      single_buffer_weights: bool) -> int:
    wb_buf = 1 if single_buffer_weights else 2
    wb_bytes = sum(int(a.size) * a.dtype.itemsize for a in padded_wb) * wb_buf
    cdt = jnp.dtype(compute_dtype).itemsize
    io_bytes = 2 * TM * dims_pad[0] * cdt + 2 * TM * dims_pad[-1] * 4
    act_bytes = 3 * TM * max(dims_pad) * 4     # carried activation + f32 temporaries
    needed = wb_bytes + io_bytes + act_bytes
    limit = max(int(needed * 1.5) + (4 << 20), 16 << 20)
    return int(min(_vmem_cap_bytes(), limit))


# ---------------------------------------------------------------------------
# kernel
# ---------------------------------------------------------------------------
def _make_fused_mlp_kernel(n_layers: int):
    """kernel(x_ref, w0,b0, w1,b1, ..., o_ref): the inter-layer activation
    never leaves VMEM/vregs; matmul on the MXU (f32 accumulation), bias + tanh
    in f32 (EUP), activation carried in compute dtype between layers."""

    def kernel(x_ref, *args):
        wb_refs = args[: 2 * n_layers]
        o_ref = args[2 * n_layers]

        a = x_ref[...]                                    # (TM, D0_pad), compute dtype
        for i in range(n_layers):
            w = wb_refs[2 * i][...]                       # (Din_pad, Dout_pad), compute dtype
            b = wb_refs[2 * i + 1][...]                   # (1, Dout_pad), f32
            y = jnp.dot(a, w, preferred_element_type=jnp.float32)
            y = y + b                                     # bias add in f32
            act = jnp.tanh(y)                             # EUP, f32
            # carry hidden activations in compute dtype; keep the final one f32
            a = act if i == n_layers - 1 else act.astype(w.dtype)
        o_ref[...] = a.astype(o_ref.dtype)

    return kernel


def _build_fused_call(n_layers, dims_pad, TM, B_pad, compute_dtype, padded_wb,
                      cost, single_buffer_weights: bool):
    grid = (B_pad // TM,)
    weight_kwargs = ({"pipeline_mode": pl.Buffered(1)}
                     if single_buffer_weights else {})

    in_specs = [pl.BlockSpec((TM, dims_pad[0]), lambda i: (i, 0))]
    for li in range(n_layers):
        din_p, dout_p = dims_pad[li], dims_pad[li + 1]
        # weights / biases are grid-invariant -> single buffer, stay resident
        in_specs.append(pl.BlockSpec((din_p, dout_p), lambda i: (0, 0),
                                     **weight_kwargs))
        in_specs.append(pl.BlockSpec((1, dout_p), lambda i: (0, 0),
                                     **weight_kwargs))

    out_spec = pl.BlockSpec((TM, dims_pad[-1]), lambda i: (i, 0))
    out_shape = jax.ShapeDtypeStruct((B_pad, dims_pad[-1]), jnp.float32)

    vmem_limit = _vmem_limit_bytes(padded_wb, TM, dims_pad, compute_dtype,
                                   single_buffer_weights)

    return pl.pallas_call(
        _make_fused_mlp_kernel(n_layers),
        out_shape=out_shape,
        grid=grid,
        in_specs=in_specs,
        out_specs=out_spec,
        compiler_params=pltpu.CompilerParams(
            dimension_semantics=("parallel",),      # megacore on v7x
            vmem_limit_bytes=vmem_limit),
        cost_estimate=cost,
    )


# ---------------------------------------------------------------------------
# public wrapper: prepare weights once, return a forward(x) closure
# ---------------------------------------------------------------------------
def make_mlp_forward(params, compute_dtype=jnp.bfloat16):
    """params: list of (w, b), w stored (in_features, out_features), b (1, out).
    Returns forward(x) running the full MLP in one fused Pallas call."""
    n_layers = len(params)
    dims = [params[0][0].shape[0]] + [w.shape[1] for w, _ in params]
    out_dim = dims[-1]
    dims_pad = [_round_up(d, 128) for d in dims]          # lane-dense feature dims

    # ---- pad + cast weights ONCE (hoisted out of the per-call path) -------
    padded_wb = []
    for i, (w, b) in enumerate(params):
        padded_wb.append(_pad2d(w, dims_pad[i], dims_pad[i + 1])
                         .astype(compute_dtype))
        padded_wb.append(_pad2d(b, 1, dims_pad[i + 1]).astype(jnp.float32))
    padded_wb = [jax.device_put(a) for a in padded_wb]

    state = {"single_buffer_weights": True}
    call_cache = {}

    def _get_call(B, TM, B_pad):
        key_ = (TM, B_pad, state["single_buffer_weights"])
        if key_ not in call_cache:
            cost = _cost_estimate(B, dims, compute_dtype)
            call_cache[key_] = _build_fused_call(
                n_layers, dims_pad, TM, B_pad, compute_dtype, padded_wb, cost,
                state["single_buffer_weights"])
        return call_cache[key_]

    def forward(x):
        B, Din = x.shape
        assert Din == dims[0], (Din, dims[0])
        TM, B_pad = _pick_batch_tile(B)
        x_pad = _pad2d(x, B_pad, dims_pad[0]).astype(compute_dtype)
        try:
            out_pad = _get_call(B, TM, B_pad)(x_pad, *padded_wb)
        except Exception:
            if not state["single_buffer_weights"]:
                raise
            # pl.Buffered(1) rejected by this jax/libtpu -> fall back to the
            # default double-buffered specs (costs VMEM only, still correct).
            state["single_buffer_weights"] = False
            out_pad = _get_call(B, TM, B_pad)(x_pad, *padded_wb)
        return out_pad[:B, :out_dim]

    return forward


# ---------------------------------------------------------------------------
# parameter init (mimics nn.Linear's U(-1/sqrt(fan_in), 1/sqrt(fan_in)))
# and a pure-JAX reference of MLP.forward (tanh after every layer, incl. out)
# ---------------------------------------------------------------------------
def init_mlp_params(key, in_dim, out_dim, hidden_dims=(64,)):
    in_dims = [in_dim] + list(hidden_dims)
    out_dims = list(hidden_dims) + [out_dim]
    params = []
    for _in, _out in zip(in_dims, out_dims):
        key, kw, kb = jax.random.split(key, 3)
        bound = 1.0 / math.sqrt(_in)
        w = jax.random.uniform(kw, (_in, _out), jnp.float32, -bound, bound)
        b = jax.random.uniform(kb, (1, _out), jnp.float32, -bound, bound)
        params.append((w, b))
    return params


def mlp_reference(params, x):
    for w, b in params:
        x = jnp.tanh(x @ w + b)
    return x


if __name__ == "__main__":
    key = jax.random.PRNGKey(0)
    k_params, k_x = jax.random.split(key)

    batch, in_dim, out_dim = 2, 16, 8
    hidden_dims = (64,)

    params = init_mlp_params(k_params, in_dim, out_dim, hidden_dims)
    x = jax.random.normal(k_x, (batch, in_dim), jnp.float32)

    ref = mlp_reference(params, x)

    # Default fast path: bf16 MXU operands, f32 accumulation.
    fwd_bf16 = make_mlp_forward(params)                       # compute_dtype=bf16
    out_bf16 = jax.block_until_ready(fwd_bf16(x))
    assert out_bf16.shape == (batch, out_dim), out_bf16.shape
    assert jnp.allclose(out_bf16, ref, atol=3e-2, rtol=3e-2), \
        "bf16 path mismatch vs pure-JAX reference"

    # f32 validation path: tight tolerance.
    fwd_f32 = make_mlp_forward(params, compute_dtype=jnp.float32)
    out_f32 = jax.block_until_ready(fwd_f32(x))
    assert out_f32.shape == (batch, out_dim), out_f32.shape
    assert jnp.allclose(out_f32, ref, atol=1e-5, rtol=1e-5), \
        "f32 path mismatch vs pure-JAX reference"

    print("KERNEL_OK")
</pallas_src>

<mosaic_0001>
module attributes {stable_mosaic.version = 11 : i64} {
  func.func @kernel(%arg0: i32, %arg1: memref<8x128xbf16, #tpu.memory_space<vmem>>, %arg2: memref<128x128xbf16, #tpu.memory_space<vmem>>, %arg3: memref<1x128xf32, #tpu.memory_space<vmem>>, %arg4: memref<128x128xbf16, #tpu.memory_space<vmem>>, %arg5: memref<1x128xf32, #tpu.memory_space<vmem>>, %arg6: memref<8x128xf32, #tpu.memory_space<vmem>>) attributes {dimension_semantics = [#tpu.dimension_semantics<parallel>], iteration_bounds = array<i64: 1>, scalar_prefetch = 0 : i64, scratch_operands = 0 : i64, tpu.core_type = #tpu.core_type<tc>, window_params = [{transform_indices = @transform_0, window_bounds = array<i64: 8, 128>}, {pipeline_mode = #tpu.pipeline_mode<synchronous>, transform_indices = @transform_1, window_bounds = array<i64: 128, 128>}, {pipeline_mode = #tpu.pipeline_mode<synchronous>, transform_indices = @transform_2, window_bounds = array<i64: 1, 128>}, {pipeline_mode = #tpu.pipeline_mode<synchronous>, transform_indices = @transform_3, window_bounds = array<i64: 128, 128>}, {pipeline_mode = #tpu.pipeline_mode<synchronous>, transform_indices = @transform_4, window_bounds = array<i64: 1, 128>}, {transform_indices = @transform_5, window_bounds = array<i64: 8, 128>}]} {
    %c0 = arith.constant 0 : index
    %c0_0 = arith.constant 0 : index
    %0 = vector.load %arg1[%c0, %c0_0] : memref<8x128xbf16, #tpu.memory_space<vmem>>, vector<8x128xbf16>
    %c0_1 = arith.constant 0 : index
    %c0_2 = arith.constant 0 : index
    %1 = vector.load %arg2[%c0_1, %c0_2] : memref<128x128xbf16, #tpu.memory_space<vmem>>, vector<128x128xbf16>
    %c0_3 = arith.constant 0 : index
    %c0_4 = arith.constant 0 : index
    %2 = vector.load %arg3[%c0_3, %c0_4] : memref<1x128xf32, #tpu.memory_space<vmem>>, vector<1x128xf32>
    %cst = arith.constant dense<0.000000e+00> : vector<8x128xf32>
    %3 = tpu.matmul %0, %1, %cst {dimension_numbers = #tpu.dot_dimension_numbers<[1], [0], [0], [1], [0, 0, 1, 1], [], []>} : vector<8x128xbf16>, vector<128x128xbf16>, vector<8x128xf32> -> vector<8x128xf32>
    %4 = vector.broadcast %2 : vector<1x128xf32> to vector<8x128xf32>
    %5 = arith.addf %3, %4 : vector<8x128xf32>
    %6 = math.tanh %5 : vector<8x128xf32>
    %7 = arith.truncf %6 : vector<8x128xf32> to vector<8x128xbf16>
    %c0_5 = arith.constant 0 : index
    %c0_6 = arith.constant 0 : index
    %8 = vector.load %arg4[%c0_5, %c0_6] : memref<128x128xbf16, #tpu.memory_space<vmem>>, vector<128x128xbf16>
    %c0_7 = arith.constant 0 : index
    %c0_8 = arith.constant 0 : index
    %9 = vector.load %arg5[%c0_7, %c0_8] : memref<1x128xf32, #tpu.memory_space<vmem>>, vector<1x128xf32>
    %cst_9 = arith.constant dense<0.000000e+00> : vector<8x128xf32>
    %10 = tpu.matmul %7, %8, %cst_9 {dimension_numbers = #tpu.dot_dimension_numbers<[1], [0], [0], [1], [0, 0, 1, 1], [], []>} : vector<8x128xbf16>, vector<128x128xbf16>, vector<8x128xf32> -> vector<8x128xf32>
    %11 = vector.broadcast %9 : vector<1x128xf32> to vector<8x128xf32>
    %12 = arith.addf %10, %11 : vector<8x128xf32>
    %13 = math.tanh %12 : vector<8x128xf32>
    %c0_10 = arith.constant 0 : index
    %c0_11 = arith.constant 0 : index
    %14 = vector.load %arg6[%c0_10, %c0_11] : memref<8x128xf32, #tpu.memory_space<vmem>>, vector<8x128xf32>
    tpu.vector_store %arg6[%c0_10, %c0_11], %13 {strides = array<i32>} : memref<8x128xf32, #tpu.memory_space<vmem>>, vector<8x128xf32>,
    return
  }
  func.func @transform_0(%arg0: i32) -> (i32, i32) {
    %c0_i32 = arith.constant 0 : i32
    %c0_i32_0 = arith.constant 0 : i32
    return %arg0, %c0_i32 : i32, i32
  }
  func.func @transform_1(%arg0: i32) -> (i32, i32) {
    %c0_i32 = arith.constant 0 : i32
    %c0_i32_0 = arith.constant 0 : i32
    %c0_i32_1 = arith.constant 0 : i32
    return %c0_i32, %c0_i32_0 : i32, i32
  }
  func.func @transform_2(%arg0: i32) -> (i32, i32) {
    %c0_i32 = arith.constant 0 : i32
    %c0_i32_0 = arith.constant 0 : i32
    %c0_i32_1 = arith.constant 0 : i32
    return %c0_i32, %c0_i32_0 : i32, i32
  }
  func.func @transform_3(%arg0: i32) -> (i32, i32) {
    %c0_i32 = arith.constant 0 : i32
    %c0_i32_0 = arith.constant 0 : i32
    %c0_i32_1 = arith.constant 0 : i32
    return %c0_i32, %c0_i32_0 : i32, i32
  }
  func.func @transform_4(%arg0: i32) -> (i32, i32) {
    %c0_i32 = arith.constant 0 : i32
    %c0_i32_0 = arith.constant 0 : i32
    %c0_i32_1 = arith.constant 0 : i32
    return %c0_i32, %c0_i32_0 : i32, i32
  }
  func.func @transform_5(%arg0: i32) -> (i32, i32) {
    %c0_i32 = arith.constant 0 : i32
    %c0_i32_0 = arith.constant 0 : i32
    return %arg0, %c0_i32 : i32, i32
  }
}

module attributes {stable_mosaic.version = 11 : i64} {
  func.func @kernel(%arg0: i32, %arg1: memref<8x128xbf16, #tpu.memory_space<vmem>>, %arg2: memref<128x128xbf16, #tpu.memory_space<vmem>>, %arg3: memref<1x128xf32, #tpu.memory_space<vmem>>, %arg4: memref<128x128xbf16, #tpu.memory_space<vmem>>, %arg5: memref<1x128xf32, #tpu.memory_space<vmem>>, %arg6: memref<8x128xf32, #tpu.memory_space<vmem>>) attributes {dimension_semantics = [#tpu.dimension_semantics<parallel>], iteration_bounds = array<i64: 1>, scalar_prefetch = 0 : i64, scratch_operands = 0 : i64, tpu.core_type = #tpu.core_type<tc>, window_params = [{transform_indices = @transform_0, window_bounds = array<i64: 8, 128>}, {pipeline_mode = #tpu.pipeline_mode<synchronous>, transform_indices = @transform_1, window_bounds = array<i64: 128, 128>}, {pipeline_mode = #tpu.pipeline_mode<synchronous>, transform_indices = @transform_2, window_bounds = array<i64: 1, 128>}, {pipeline_mode = #tpu.pipeline_mode<synchronous>, transform_indices = @transform_3, window_bounds = array<i64: 128, 128>}, {pipeline_mode = #tpu.pipeline_mode<synchronous>, transform_indices = @transform_4, window_bounds = array<i64: 1, 128>}, {transform_indices = @transform_5, window_bounds = array<i64: 8, 128>}]} {
    %c0 = arith.constant 0 : index
    %c0_0 = arith.constant 0 : index
    %0 = vector.load %arg1[%c0, %c0_0] : memref<8x128xbf16, #tpu.memory_space<vmem>>, vector<8x128xbf16>
    %c0_1 = arith.constant 0 : index
    %c0_2 = arith.constant 0 : index
    %1 = vector.load %arg2[%c0_1, %c0_2] : memref<128x128xbf16, #tpu.memory_space<vmem>>, vector<128x128xbf16>
    %c0_3 = arith.constant 0 : index
    %c0_4 = arith.constant 0 : index
    %2 = vector.load %arg3[%c0_3, %c0_4] : memref<1x128xf32, #tpu.memory_space<vmem>>, vector<1x128xf32>
    %cst = arith.constant dense<0.000000e+00> : vector<8x128xf32>
    %3 = tpu.matmul %0, %1, %cst {dimension_numbers = #tpu.dot_dimension_numbers<[1], [0], [0], [1], [0, 0, 1, 1], [], []>} : vector<8x128xbf16>, vector<128x128xbf16>, vector<8x128xf32> -> vector<8x128xf32>
    %4 = vector.broadcast %2 : vector<1x128xf32> to vector<8x128xf32>
    %5 = arith.addf %3, %4 : vector<8x128xf32>
    %6 = math.tanh %5 : vector<8x128xf32>
    %7 = arith.truncf %6 : vector<8x128xf32> to vector<8x128xbf16>
    %c0_5 = arith.constant 0 : index
    %c0_6 = arith.constant 0 : index
    %8 = vector.load %arg4[%c0_5, %c0_6] : memref<128x128xbf16, #tpu.memory_space<vmem>>, vector<128x128xbf16>
    %c0_7 = arith.constant 0 : index
    %c0_8 = arith.constant 0 : index
    %9 = vector.load %arg5[%c0_7, %c0_8] : memref<1x128xf32, #tpu.memory_space<vmem>>, vector<1x128xf32>
    %cst_9 = arith.constant dense<0.000000e+00> : vector<8x128xf32>
    %10 = tpu.matmul %7, %8, %cst_9 {dimension_numbers = #tpu.dot_dimension_numbers<[1], [0], [0], [1], [0, 0, 1, 1], [], []>} : vector<8x128xbf16>, vector<128x128xbf16>, vector<8x128xf32> -> vector<8x128xf32>
    %11 = vector.broadcast %9 : vector<1x128xf32> to vector<8x128xf32>
    %12 = arith.addf %10, %11 : vector<8x128xf32>
    %13 = math.tanh %12 : vector<8x128xf32>
    %c0_10 = arith.constant 0 : index
    %c0_11 = arith.constant 0 : index
    %14 = vector.load %arg6[%c0_10, %c0_11] : memref<8x128xf32, #tpu.memory_space<vmem>>, vector<8x128xf32>
    tpu.vector_store %arg6[%c0_10, %c0_11], %13 {strides = array<i32>} : memref<8x128xf32, #tpu.memory_space<vmem>>, vector<8x128xf32>,
    return
  }
  func.func @transform_0(%arg0: i32) -> (i32, i32) {
    %c0_i32 = arith.constant 0 : i32
    %c0_i32_0 = arith.constant 0 : i32
    return %arg0, %c0_i32 : i32, i32
  }
  func.func @transform_1(%arg0: i32) -> (i32, i32) {
    %c0_i32 = arith.constant 0 : i32
    %c0_i32_0 = arith.constant 0 : i32
    %c0_i32_1 = arith.constant 0 : i32
    return %c0_i32, %c0_i32_0 : i32, i32
  }
  func.func @transform_2(%arg0: i32) -> (i32, i32) {
    %c0_i32 = arith.constant 0 : i32
    %c0_i32_0 = arith.constant 0 : i32
    %c0_i32_1 = arith.constant 0 : i32
    return %c0_i32, %c0_i32_0 : i32, i32
  }
  func.func @transform_3(%arg0: i32) -> (i32, i32) {
    %c0_i32 = arith.constant 0 : i32
    %c0_i32_0 = arith.constant 0 : i32
    %c0_i32_1 = arith.constant 0 : i32
    return %c0_i32, %c0_i32_0 : i32, i32
  }
  func.func @transform_4(%arg0: i32) -> (i32, i32) {
    %c0_i32 = arith.constant 0 : i32
    %c0_i32_0 = arith.constant 0 : i32
    %c0_i32_1 = arith.constant 0 : i32
    return %c0_i32, %c0_i32_0 : i32, i32
  }
  func.func @transform_5(%arg0: i32) -> (i32, i32) {
    %c0_i32 = arith.constant 0 : i32
    %c0_i32_0 = arith.constant 0 : i32
    return %arg0, %c0_i32 : i32, i32
  }
}

</mosaic_0001>

<llo_original>
// kernel: tpu_custom_call.1
$region0: #{tpu_custom_call.1}
  #allocation0 [shape = 'u32[]', space=smem, size = 0x4, offset = 0x4, fixed_abs, tag = 'smem constant byte address 0x4 - core index']
  #allocation1 [shape = 'u32[72,128]{1,0:T(1,128)}', space=vmem, size = 0x9000, scoped, tag = 'internal scratch']
  %s0 = inlined_call_operand.hbm [shape: bf16[8,128], index: 0, kind: input, shape index: {}]
  %s1 = inlined_call_operand.hbm [shape: bf16[128,128], index: 1, kind: input, shape index: {}]
  %s2 = inlined_call_operand.vmem [shape: f32[1,128], index: 2, kind: input, shape index: {}]
  %s3 = inlined_call_operand.hbm [shape: bf16[128,128], index: 3, kind: input, shape index: {}]
  %s4 = inlined_call_operand.vmem [shape: f32[1,128], index: 4, kind: input, shape index: {}]
  %s5 = inlined_call_operand.hbm [shape: f32[8,128], index: 5, kind: output, shape index: {}]
  %s6 = sld [smem:[#allocation0]]
  $region42: #{tpu_custom_call.1} parent=0
    _
  %s8 = ssub.s32 1, %s6
  %s9 = scalar_select 0, %s8, %s6
  $region1: #{tpu_custom_call.1} parent=0
    #allocation2 [shape = 'u8[2048]{0}', space=vmem, size = 0x800, scoped, tag = 'input window, operand 0, single buffered']
    #allocation3 [shape = 's32[1]{0}', space=sflag, size = 0x4, scoped, tag = 'scoped memory for tpu_custom_call.1']
    #allocation4 [shape = 's32[1]{0}', space=sflag, size = 0x4, scoped, tag = 'scoped memory for tpu_custom_call.1']
    #allocation5 [shape = 'u8[32768]{0}', space=vmem, size = 0x8000, scoped, tag = 'input window, operand 1, single buffered']
    #allocation6 [shape = 's32[1]{0}', space=sflag, size = 0x4, scoped, tag = 'scoped memory for tpu_custom_call.1']
    #allocation7 [shape = 'u8[32768]{0}', space=vmem, size = 0x8000, scoped, tag = 'input window, operand 3, single buffered']
    #allocation8 [shape = 'u8[4096]{0}', space=vmem, size = 0x1000, scoped, tag = 'output window, operand 0, single buffered']
    %10 = vsyncpa [#allocation3], 0
    %11 = vsyncpa [#allocation6], 0
    %12 = vsyncpa [#allocation4], 0
    // Predicated region
    $region2: #{tpu_custom_call.1} parent=1 // pred_check
      _
    $region3: #{tpu_custom_call.1} parent=1 // pred_check_branch
      %14 = sbr.rel (0) target = $region5
    $region4: #{tpu_custom_call.1} parent=1 // pred_region
      %16 = vsyncadd [#allocation3], 0
      %s18 = sshll.u32 %s0, 4
      %s19 = int_to_ptr.hbm [resolvable:$true] %s18
      %s20 = sshll.u32 [#allocation2], 4
      %s21 = int_to_ptr.vmem [resolvable:$true] %s20
      %23 = dma.hbm_to_vmem [thread:$0]  %s19, 64, %s21, [#allocation3]
    $region5: #{tpu_custom_call.1} parent=1 // pred_fallthru
      _
    // Predicated region
    $region6: #{tpu_custom_call.1} parent=1 // pred_check
      _
    $region7: #{tpu_custom_call.1} parent=1 // pred_check_branch
      %25 = sbr.rel (0) target = $region9
    $region8: #{tpu_custom_call.1} parent=1 // pred_region
      %27 = vsyncadd [#allocation6], 0
      %s28 = sshll.u32 %s1, 4
      %s29 = int_to_ptr.hbm [resolvable:$true] %s28
      %s30 = sshll.u32 [#allocation5], 4
      %s31 = int_to_ptr.vmem [resolvable:$true] %s30
      %36 = dma.hbm_to_vmem [thread:$0]  %s29, 1024, %s31, [#allocation6], 64, 64, 4
    $region9: #{tpu_custom_call.1} parent=1 // pred_fallthru
      _
    // Predicated region
    $region10: #{tpu_custom_call.1} parent=1 // pred_check
      _
    $region11: #{tpu_custom_call.1} parent=1 // pred_check_branch
      %38 = sbr.rel (0) target = $region13
    $region12: #{tpu_custom_call.1} parent=1 // pred_region
      _
    $region13: #{tpu_custom_call.1} parent=1 // pred_fallthru
      _
    // Predicated region
    $region14: #{tpu_custom_call.1} parent=1 // pred_check
      _
    $region15: #{tpu_custom_call.1} parent=1 // pred_check_branch
      %40 = sbr.rel (0) target = $region17
    $region16: #{tpu_custom_call.1} parent=1 // pred_region
      %42 = vsyncadd [#allocation6], 0
      %s43 = sshll.u32 %s3, 4
      %s44 = int_to_ptr.hbm [resolvable:$true] %s43
      %s45 = sshll.u32 [#allocation7], 4
      %s46 = int_to_ptr.vmem [resolvable:$true] %s45
      %51 = dma.hbm_to_vmem [thread:$0]  %s44, 1024, %s46, [#allocation6], 64, 64, 4
    $region17: #{tpu_custom_call.1} parent=1 // pred_fallthru
      _
    // Predicated region
    $region18: #{tpu_custom_call.1} parent=1 // pred_check
      _
    $region19: #{tpu_custom_call.1} parent=1 // pred_check_branch
      %53 = sbr.rel (0) target = $region21
    $region20: #{tpu_custom_call.1} parent=1 // pred_region
      _
    $region21: #{tpu_custom_call.1} parent=1 // pred_fallthru
      _
    // Predicated region
    $region22: #{tpu_custom_call.1} parent=1 // pred_check
      _
    $region23: #{tpu_custom_call.1} parent=1 // pred_check_branch
      %55 = sbr.rel (0) target = $region25
    $region24: #{tpu_custom_call.1} parent=1 // pred_region
      %57 = dma.done [#allocation3], 64
    $region25: #{tpu_custom_call.1} parent=1 // pred_fallthru
      _
    // Predicated region
    $region26: #{tpu_custom_call.1} parent=1 // pred_check
      _
    $region27: #{tpu_custom_call.1} parent=1 // pred_check_branch
      %59 = sbr.rel (0) target = $region29
    $region28: #{tpu_custom_call.1} parent=1 // pred_region
      %61 = dma.done [#allocation6], 1024
    $region29: #{tpu_custom_call.1} parent=1 // pred_fallthru
      _
    // Predicated region
    $region30: #{tpu_custom_call.1} parent=1 // pred_check
      _
    $region31: #{tpu_custom_call.1} parent=1 // pred_check_branch
      %63 = sbr.rel (0) target = $region33
    $region32: #{tpu_custom_call.1} parent=1 // pred_region
      %65 = dma.done [#allocation6], 1024
    $region33: #{tpu_custom_call.1} parent=1 // pred_fallthru
      _
    %v66 = vld [vmem:[#allocation2] sm:$0xf]
    %v67 = vld [vmem:[#allocation5] sm:$0xf]
    %v68 = vld [vmem:[#allocation5 + $0x4] sm:$0xf]
    %v69 = vld [vmem:[#allocation5 + $0x8] sm:$0xf]
    %v70 = vld [vmem:[#allocation5 + $0xc] sm:$0xf]
    %v71 = vld [vmem:[#allocation5 + $0x10] sm:$0xf]
    %v72 = vld [vmem:[#allocation5 + $0x14] sm:$0xf]
    %v73 = vld [vmem:[#allocation5 + $0x18] sm:$0xf]
    %v74 = vld [vmem:[#allocation5 + $0x1c] sm:$0xf]
    %v75 = vld [vmem:[#allocation5 + $0x20] sm:$0xf]
    %v76 = vld [vmem:[#allocation5 + $0x24] sm:$0xf]
    %v77 = vld [vmem:[#allocation5 + $0x28] sm:$0xf]
    %v78 = vld [vmem:[#allocation5 + $0x2c] sm:$0xf]
    %v79 = vld [vmem:[#allocation5 + $0x30] sm:$0xf]
    %v80 = vld [vmem:[#allocation5 + $0x34] sm:$0xf]
    %v81 = vld [vmem:[#allocation5 + $0x38] sm:$0xf]
    %v82 = vld [vmem:[#allocation5 + $0x3c] sm:$0xf]
    %v83 = vld [vmem:[%s2] sm:$0x1]
    %v85 = vperm.slane %v83, 0
    %v103 = vunpack.c.l.b16 %v67
    %v104 = vunpack.c.l.b16 %v68
    %v105 = vunpack.c.l.b16 %v69
    %v106 = vunpack.c.l.b16 %v70
    %v107 = vunpack.c.l.b16 %v71
    %v108 = vunpack.c.l.b16 %v72
    %v109 = vunpack.c.l.b16 %v73
    %v110 = vunpack.c.l.b16 %v74
    %v111 = vunpack.c.l.b16 %v75
    %v112 = vunpack.c.l.b16 %v76
    %v113 = vunpack.c.l.b16 %v77
    %v114 = vunpack.c.l.b16 %v78
    %v115 = vunpack.c.l.b16 %v79
    %v116 = vunpack.c.l.b16 %v80
    %v117 = vunpack.c.l.b16 %v81
    %v118 = vunpack.c.l.b16 %v82
    %v119 = vpack.c.b16 %v104, %v103
    %v120 = vpack.c.b16 %v106, %v105
    %v121 = vpack.c.b16 %v108, %v107
    %v122 = vpack.c.b16 %v110, %v109
    %v123 = vpack.c.b16 %v112, %v111
    %v124 = vpack.c.b16 %v114, %v113
    %v125 = vpack.c.b16 %v116, %v115
    %v126 = vpack.c.b16 %v118, %v117
    %135 = vmatpush.bf16.msra.mxu0 %v126
    %136 = vmatpush.bf16.msra.mxu0 %v125
    %137 = vmatpush.bf16.msra.mxu0 %v124
    %138 = vmatpush.bf16.msra.mxu0 %v123
    %139 = vmatpush.bf16.msra.mxu0 %v122
    %140 = vmatpush.bf16.msra.mxu0 %v121
    %141 = vmatpush.bf16.msra.mxu0 %v120
    %142 = vmatpush.bf16.msra.mxu0 %v119
    %143 = vmatmul.bf16.gmra.mxu0 %v66
    %v144 = vpop.f32.mrf.mxu0
    %v145 = vadd.f32 %v85, %v144
    %v146 = vpop.f32.mrf.mxu0
    %147 = vdwg.mxu0
    %v148 = vtanh.pop %v145
    %v149 = vpack.c.bf16 %v148, %v148
    %v150 = vld [vmem:[#allocation7] sm:$0xf]
    %v151 = vld [vmem:[#allocation7 + $0x4] sm:$0xf]
    %v152 = vld [vmem:[#allocation7 + $0x8] sm:$0xf]
    %v153 = vld [vmem:[#allocation7 + $0xc] sm:$0xf]
    %v154 = vld [vmem:[#allocation7 + $0x10] sm:$0xf]
    %v155 = vld [vmem:[#allocation7 + $0x14] sm:$0xf]
    %v156 = vld [vmem:[#allocation7 + $0x18] sm:$0xf]
    %v157 = vld [vmem:[#allocation7 + $0x1c] sm:$0xf]
    %v158 = vld [vmem:[#allocation7 + $0x20] sm:$0xf]
    %v159 = vld [vmem:[#allocation7 + $0x24] sm:$0xf]
    %v160 = vld [vmem:[#allocation7 + $0x28] sm:$0xf]
    %v161 = vld [vmem:[#allocation7 + $0x2c] sm:$0xf]
    %v162 = vld [vmem:[#allocation7 + $0x30] sm:$0xf]
    %v163 = vld [vmem:[#allocation7 + $0x34] sm:$0xf]
    %v164 = vld [vmem:[#allocation7 + $0x38] sm:$0xf]
    %v165 = vld [vmem:[#allocation7 + $0x3c] sm:$0xf]
    %v166 = vld [vmem:[%s4] sm:$0x1]
    %v168 = vperm.slane %v166, 0
    %v186 = vunpack.c.l.b16 %v150
    %v187 = vunpack.c.l.b16 %v151
    %v188 = vunpack.c.l.b16 %v152
    %v189 = vunpack.c.l.b16 %v153
    %v190 = vunpack.c.l.b16 %v154
    %v191 = vunpack.c.l.b16 %v155
    %v192 = vunpack.c.l.b16 %v156
    %v193 = vunpack.c.l.b16 %v157
    %v194 = vunpack.c.l.b16 %v158
    %v195 = vunpack.c.l.b16 %v159
    %v196 = vunpack.c.l.b16 %v160
    %v197 = vunpack.c.l.b16 %v161
    %v198 = vunpack.c.l.b16 %v162
    %v199 = vunpack.c.l.b16 %v163
    %v200 = vunpack.c.l.b16 %v164
    %v201 = vunpack.c.l.b16 %v165
    %v202 = vpack.c.b16 %v187, %v186
    %v203 = vpack.c.b16 %v189, %v188
    %v204 = vpack.c.b16 %v191, %v190
    %v205 = vpack.c.b16 %v193, %v192
    %v206 = vpack.c.b16 %v195, %v194
    %v207 = vpack.c.b16 %v197, %v196
    %v208 = vpack.c.b16 %v199, %v198
    %v209 = vpack.c.b16 %v201, %v200
    %218 = vmatpush.bf16.msra.mxu0 %v209
    %219 = vmatpush.bf16.msra.mxu0 %v208
    %220 = vmatpush.bf16.msra.mxu0 %v207
    %221 = vmatpush.bf16.msra.mxu0 %v206
    %222 = vmatpush.bf16.msra.mxu0 %v205
    %223 = vmatpush.bf16.msra.mxu0 %v204
    %224 = vmatpush.bf16.msra.mxu0 %v203
    %225 = vmatpush.bf16.msra.mxu0 %v202
    %226 = vmatmul.bf16.gmra.mxu0 %v149
    %v227 = vpop.f32.mrf.mxu0
    %v228 = vadd.f32 %v168, %v227
    %v229 = vpop.f32.mrf.mxu0
    %230 = vdwg.mxu0
    %v231 = vtanh.pop %v228
    %232 = vst [vmem:[#allocation8] sm:$0xff] %v231
    // Predicated region
    $region34: #{tpu_custom_call.1} parent=1 // pred_check
      _
    $region35: #{tpu_custom_call.1} parent=1 // pred_check_branch
      %234 = sbr.rel (0) target = $region37
    $region36: #{tpu_custom_call.1} parent=1 // pred_region
      %236 = vsyncadd [#allocation4], 0
      %s238 = sshll.u32 [#allocation8], 4
      %s239 = int_to_ptr.vmem [resolvable:$true] %s238
      %s240 = sshll.u32 %s5, 4
      %s241 = int_to_ptr.hbm [resolvable:$true] %s240
      %243 = dma.vmem_to_hbm [thread:$0]  %s239, 128, %s241, [#allocation4]
    $region37: #{tpu_custom_call.1} parent=1 // pred_fallthru
      _
    // Predicated region
    $region38: #{tpu_custom_call.1} parent=1 // pred_check
      _
    $region39: #{tpu_custom_call.1} parent=1 // pred_check_branch
      %245 = sbr.rel (0) target = $region41
    $region40: #{tpu_custom_call.1} parent=1 // pred_region
      %247 = dma.done [#allocation4], 128
    $region41: #{tpu_custom_call.1} parent=1 // pred_fallthru
      _
    %248 = vsyncpa [#allocation3], 1
    %249 = vsyncpa [#allocation6], 1
    %250 = vsyncpa [#allocation4], 1

// kernel: tpu_custom_call.1
$region0: #{tpu_custom_call.1}
  #allocation0 [shape = 'u32[]', space=smem, size = 0x4, offset = 0x4, fixed_abs, tag = 'smem constant byte address 0x4 - core index']
  #allocation1 [shape = 'u32[72,128]{1,0:T(1,128)}', space=vmem, size = 0x9000, scoped, tag = 'internal scratch']
  %s0 = inlined_call_operand.hbm [shape: bf16[8,128], index: 0, kind: input, shape index: {}]
  %s1 = inlined_call_operand.hbm [shape: bf16[128,128], index: 1, kind: input, shape index: {}]
  %s2 = inlined_call_operand.vmem [shape: f32[1,128], index: 2, kind: input, shape index: {}]
  %s3 = inlined_call_operand.hbm [shape: bf16[128,128], index: 3, kind: input, shape index: {}]
  %s4 = inlined_call_operand.vmem [shape: f32[1,128], index: 4, kind: input, shape index: {}]
  %s5 = inlined_call_operand.hbm [shape: f32[8,128], index: 5, kind: output, shape index: {}]
  %s6 = sld [smem:[#allocation0]]
  $region42: #{tpu_custom_call.1} parent=0
    _
  %s8 = ssub.s32 1, %s6
  %s9 = scalar_select 0, %s8, %s6
  $region1: #{tpu_custom_call.1} parent=0
    #allocation2 [shape = 'u8[2048]{0}', space=vmem, size = 0x800, scoped, tag = 'input window, operand 0, single buffered']
    #allocation3 [shape = 's32[1]{0}', space=sflag, size = 0x4, scoped, tag = 'scoped memory for tpu_custom_call.1']
    #allocation4 [shape = 's32[1]{0}', space=sflag, size = 0x4, scoped, tag = 'scoped memory for tpu_custom_call.1']
    #allocation5 [shape = 'u8[32768]{0}', space=vmem, size = 0x8000, scoped, tag = 'input window, operand 1, single buffered']
    #allocation6 [shape = 's32[1]{0}', space=sflag, size = 0x4, scoped, tag = 'scoped memory for tpu_custom_call.1']
    #allocation7 [shape = 'u8[32768]{0}', space=vmem, size = 0x8000, scoped, tag = 'input window, operand 3, single buffered']
    #allocation8 [shape = 'u8[4096]{0}', space=vmem, size = 0x1000, scoped, tag = 'output window, operand 0, single buffered']
    %10 = vsyncpa [#allocation3], 0
    %11 = vsyncpa [#allocation6], 0
    %12 = vsyncpa [#allocation4], 0
    // Predicated region
    $region2: #{tpu_custom_call.1} parent=1 // pred_check
      _
    $region3: #{tpu_custom_call.1} parent=1 // pred_check_branch
      %14 = sbr.rel (0) target = $region5
    $region4: #{tpu_custom_call.1} parent=1 // pred_region
      %16 = vsyncadd [#allocation3], 0
      %s18 = sshll.u32 %s0, 4
      %s19 = int_to_ptr.hbm [resolvable:$true] %s18
      %s20 = sshll.u32 [#allocation2], 4
      %s21 = int_to_ptr.vmem [resolvable:$true] %s20
      %23 = dma.hbm_to_vmem [thread:$0]  %s19, 64, %s21, [#allocation3]
    $region5: #{tpu_custom_call.1} parent=1 // pred_fallthru
      _
    // Predicated region
    $region6: #{tpu_custom_call.1} parent=1 // pred_check
      _
    $region7: #{tpu_custom_call.1} parent=1 // pred_check_branch
      %25 = sbr.rel (0) target = $region9
    $region8: #{tpu_custom_call.1} parent=1 // pred_region
      %27 = vsyncadd [#allocation6], 0
      %s28 = sshll.u32 %s1, 4
      %s29 = int_to_ptr.hbm [resolvable:$true] %s28
      %s30 = sshll.u32 [#allocation5], 4
      %s31 = int_to_ptr.vmem [resolvable:$true] %s30
      %36 = dma.hbm_to_vmem [thread:$0]  %s29, 1024, %s31, [#allocation6], 64, 64, 4
    $region9: #{tpu_custom_call.1} parent=1 // pred_fallthru
      _
    // Predicated region
    $region10: #{tpu_custom_call.1} parent=1 // pred_check
      _
    $region11: #{tpu_custom_call.1} parent=1 // pred_check_branch
      %38 = sbr.rel (0) target = $region13
    $region12: #{tpu_custom_call.1} parent=1 // pred_region
      _
    $region13: #{tpu_custom_call.1} parent=1 // pred_fallthru
      _
    // Predicated region
    $region14: #{tpu_custom_call.1} parent=1 // pred_check
      _
    $region15: #{tpu_custom_call.1} parent=1 // pred_check_branch
      %40 = sbr.rel (0) target = $region17
    $region16: #{tpu_custom_call.1} parent=1 // pred_region
      %42 = vsyncadd [#allocation6], 0
      %s43 = sshll.u32 %s3, 4
      %s44 = int_to_ptr.hbm [resolvable:$true] %s43
      %s45 = sshll.u32 [#allocation7], 4
      %s46 = int_to_ptr.vmem [resolvable:$true] %s45
      %51 = dma.hbm_to_vmem [thread:$0]  %s44, 1024, %s46, [#allocation6], 64, 64, 4
    $region17: #{tpu_custom_call.1} parent=1 // pred_fallthru
      _
    // Predicated region
    $region18: #{tpu_custom_call.1} parent=1 // pred_check
      _
    $region19: #{tpu_custom_call.1} parent=1 // pred_check_branch
      %53 = sbr.rel (0) target = $region21
    $region20: #{tpu_custom_call.1} parent=1 // pred_region
      _
    $region21: #{tpu_custom_call.1} parent=1 // pred_fallthru
      _
    // Predicated region
    $region22: #{tpu_custom_call.1} parent=1 // pred_check
      _
    $region23: #{tpu_custom_call.1} parent=1 // pred_check_branch
      %55 = sbr.rel (0) target = $region25
    $region24: #{tpu_custom_call.1} parent=1 // pred_region
      %57 = dma.done [#allocation3], 64
    $region25: #{tpu_custom_call.1} parent=1 // pred_fallthru
      _
    // Predicated region
    $region26: #{tpu_custom_call.1} parent=1 // pred_check
      _
    $region27: #{tpu_custom_call.1} parent=1 // pred_check_branch
      %59 = sbr.rel (0) target = $region29
    $region28: #{tpu_custom_call.1} parent=1 // pred_region
      %61 = dma.done [#allocation6], 1024
    $region29: #{tpu_custom_call.1} parent=1 // pred_fallthru
      _
    // Predicated region
    $region30: #{tpu_custom_call.1} parent=1 // pred_check
      _
    $region31: #{tpu_custom_call.1} parent=1 // pred_check_branch
      %63 = sbr.rel (0) target = $region33
    $region32: #{tpu_custom_call.1} parent=1 // pred_region
      %65 = dma.done [#allocation6], 1024
    $region33: #{tpu_custom_call.1} parent=1 // pred_fallthru
      _
    %v66 = vld [vmem:[#allocation2] sm:$0xf]
    %v67 = vld [vmem:[#allocation5] sm:$0xf]
    %v68 = vld [vmem:[#allocation5 + $0x4] sm:$0xf]
    %v69 = vld [vmem:[#allocation5 + $0x8] sm:$0xf]
    %v70 = vld [vmem:[#allocation5 + $0xc] sm:$0xf]
    %v71 = vld [vmem:[#allocation5 + $0x10] sm:$0xf]
    %v72 = vld [vmem:[#allocation5 + $0x14] sm:$0xf]
    %v73 = vld [vmem:[#allocation5 + $0x18] sm:$0xf]
    %v74 = vld [vmem:[#allocation5 + $0x1c] sm:$0xf]
    %v75 = vld [vmem:[#allocation5 + $0x20] sm:$0xf]
    %v76 = vld [vmem:[#allocation5 + $0x24] sm:$0xf]
    %v77 = vld [vmem:[#allocation5 + $0x28] sm:$0xf]
    %v78 = vld [vmem:[#allocation5 + $0x2c] sm:$0xf]
    %v79 = vld [vmem:[#allocation5 + $0x30] sm:$0xf]
    %v80 = vld [vmem:[#allocation5 + $0x34] sm:$0xf]
    %v81 = vld [vmem:[#allocation5 + $0x38] sm:$0xf]
    %v82 = vld [vmem:[#allocation5 + $0x3c] sm:$0xf]
    %v83 = vld [vmem:[%s2] sm:$0x1]
    %v85 = vperm.slane %v83, 0
    %v103 = vunpack.c.l.b16 %v67
    %v104 = vunpack.c.l.b16 %v68
    %v105 = vunpack.c.l.b16 %v69
    %v106 = vunpack.c.l.b16 %v70
    %v107 = vunpack.c.l.b16 %v71
    %v108 = vunpack.c.l.b16 %v72
    %v109 = vunpack.c.l.b16 %v73
    %v110 = vunpack.c.l.b16 %v74
    %v111 = vunpack.c.l.b16 %v75
    %v112 = vunpack.c.l.b16 %v76
    %v113 = vunpack.c.l.b16 %v77
    %v114 = vunpack.c.l.b16 %v78
    %v115 = vunpack.c.l.b16 %v79
    %v116 = vunpack.c.l.b16 %v80
    %v117 = vunpack.c.l.b16 %v81
    %v118 = vunpack.c.l.b16 %v82
    %v119 = vpack.c.b16 %v104, %v103
    %v120 = vpack.c.b16 %v106, %v105
    %v121 = vpack.c.b16 %v108, %v107
    %v122 = vpack.c.b16 %v110, %v109
    %v123 = vpack.c.b16 %v112, %v111
    %v124 = vpack.c.b16 %v114, %v113
    %v125 = vpack.c.b16 %v116, %v115
    %v126 = vpack.c.b16 %v118, %v117
    %135 = vmatpush.bf16.msra.mxu0 %v126
    %136 = vmatpush.bf16.msra.mxu0 %v125
    %137 = vmatpush.bf16.msra.mxu0 %v124
    %138 = vmatpush.bf16.msra.mxu0 %v123
    %139 = vmatpush.bf16.msra.mxu0 %v122
    %140 = vmatpush.bf16.msra.mxu0 %v121
    %141 = vmatpush.bf16.msra.mxu0 %v120
    %142 = vmatpush.bf16.msra.mxu0 %v119
    %143 = vmatmul.bf16.gmra.mxu0 %v66
    %v144 = vpop.f32.mrf.mxu0
    %v145 = vadd.f32 %v85, %v144
    %v146 = vpop.f32.mrf.mxu0
    %147 = vdwg.mxu0
    %v148 = vtanh.pop %v145
    %v149 = vpack.c.bf16 %v148, %v148
    %v150 = vld [vmem:[#allocation7] sm:$0xf]
    %v151 = vld [vmem:[#allocation7 + $0x4] sm:$0xf]
    %v152 = vld [vmem:[#allocation7 + $0x8] sm:$0xf]
    %v153 = vld [vmem:[#allocation7 + $0xc] sm:$0xf]
    %v154 = vld [vmem:[#allocation7 + $0x10] sm:$0xf]
    %v155 = vld [vmem:[#allocation7 + $0x14] sm:$0xf]
    %v156 = vld [vmem:[#allocation7 + $0x18] sm:$0xf]
    %v157 = vld [vmem:[#allocation7 + $0x1c] sm:$0xf]
    %v158 = vld [vmem:[#allocation7 + $0x20] sm:$0xf]
    %v159 = vld [vmem:[#allocation7 + $0x24] sm:$0xf]
    %v160 = vld [vmem:[#allocation7 + $0x28] sm:$0xf]
    %v161 = vld [vmem:[#allocation7 + $0x2c] sm:$0xf]
    %v162 = vld [vmem:[#allocation7 + $0x30] sm:$0xf]
    %v163 = vld [vmem:[#allocation7 + $0x34] sm:$0xf]
    %v164 = vld [vmem:[#allocation7 + $0x38] sm:$0xf]
    %v165 = vld [vmem:[#allocation7 + $0x3c] sm:$0xf]
    %v166 = vld [vmem:[%s4] sm:$0x1]
    %v168 = vperm.slane %v166, 0
    %v186 = vunpack.c.l.b16 %v150
    %v187 = vunpack.c.l.b16 %v151
    %v188 = vunpack.c.l.b16 %v152
    %v189 = vunpack.c.l.b16 %v153
    %v190 = vunpack.c.l.b16 %v154
    %v191 = vunpack.c.l.b16 %v155
    %v192 = vunpack.c.l.b16 %v156
    %v193 = vunpack.c.l.b16 %v157
    %v194 = vunpack.c.l.b16 %v158
    %v195 = vunpack.c.l.b16 %v159
    %v196 = vunpack.c.l.b16 %v160
    %v197 = vunpack.c.l.b16 %v161
    %v198 = vunpack.c.l.b16 %v162
    %v199 = vunpack.c.l.b16 %v163
    %v200 = vunpack.c.l.b16 %v164
    %v201 = vunpack.c.l.b16 %v165
    %v202 = vpack.c.b16 %v187, %v186
    %v203 = vpack.c.b16 %v189, %v188
    %v204 = vpack.c.b16 %v191, %v190
    %v205 = vpack.c.b16 %v193, %v192
    %v206 = vpack.c.b16 %v195, %v194
    %v207 = vpack.c.b16 %v197, %v196
    %v208 = vpack.c.b16 %v199, %v198
    %v209 = vpack.c.b16 %v201, %v200
    %218 = vmatpush.bf16.msra.mxu0 %v209
    %219 = vmatpush.bf16.msra.mxu0 %v208
    %220 = vmatpush.bf16.msra.mxu0 %v207
    %221 = vmatpush.bf16.msra.mxu0 %v206
    %222 = vmatpush.bf16.msra.mxu0 %v205
    %223 = vmatpush.bf16.msra.mxu0 %v204
    %224 = vmatpush.bf16.msra.mxu0 %v203
    %225 = vmatpush.bf16.msra.mxu0 %v202
    %226 = vmatmul.bf16.gmra.mxu0 %v149
    %v227 = vpop.f32.mrf.mxu0
    %v228 = vadd.f32 %v168, %v227
    %v229 = vpop.f32.mrf.mxu0
    %230 = vdwg.mxu0
    %v231 = vtanh.pop %v228
    %232 = vst [vmem:[#allocation8] sm:$0xff] %v231
    // Predicated region
    $region34: #{tpu_custom_call.1} parent=1 // pred_check
      _
    $region35: #{tpu_custom_call.1} parent=1 // pred_check_branch
      %234 = sbr.rel (0) target = $region37
    $region36: #{tpu_custom_call.1} parent=1 // pred_region
      %236 = vsyncadd [#allocation4], 0
      %s238 = sshll.u32 [#allocation8], 4
      %s239 = int_to_ptr.vmem [resolvable:$true] %s238
      %s240 = sshll.u32 %s5, 4
      %s241 = int_to_ptr.hbm [resolvable:$true] %s240
      %243 = dma.vmem_to_hbm [thread:$0]  %s239, 128, %s241, [#allocation4]
    $region37: #{tpu_custom_call.1} parent=1 // pred_fallthru
      _
    // Predicated region
    $region38: #{tpu_custom_call.1} parent=1 // pred_check
      _
    $region39: #{tpu_custom_call.1} parent=1 // pred_check_branch
      %245 = sbr.rel (0) target = $region41
    $region40: #{tpu_custom_call.1} parent=1 // pred_region
      %247 = dma.done [#allocation4], 128
    $region41: #{tpu_custom_call.1} parent=1 // pred_fallthru
      _
    %248 = vsyncpa [#allocation3], 1
    %249 = vsyncpa [#allocation6], 1
    %250 = vsyncpa [#allocation4], 1

</llo_original>
